<compile_context>
chip_gen: v5e
topology: v5e:2x2
jax: 0.10.0
libtpu: 0.0.40
codegen_flags: <defaults>
</compile_context>

<pallas_src>
import functools
import math

import jax
import jax.numpy as jnp
import numpy as np
from jax import lax
from jax.experimental import pallas as pl
from jax.experimental.pallas import tpu as pltpu


# ------------------------------ kernels ------------------------------

def _add_pe_kernel(x_ref, pe_ref, o_ref):
    x = x_ref[...]
    pe = pe_ref[...]
    if pe.ndim < x.ndim:            # 3-D path: x block (TB, TL, N), pe block (TL, N)
        pe = pe[None]
    o_ref[...] = (x + pe).astype(o_ref.dtype)


def _to_u32(v):
    return jnp.asarray(v).astype(jnp.uint32)


def _mix32(h):
    """splitmix/murmur-style 32-bit finalizer (plain 32-bit VPU integer ops)."""
    h = (h ^ (h >> 16)) * jnp.uint32(0x7FEB352D)
    h = (h ^ (h >> 15)) * jnp.uint32(0x846CA68B)
    return h ^ (h >> 16)


def _add_pe_dropout_kernel(seed_ref, x_ref, pe_ref, o_ref, *,
                           keep_threshold, scale, strides, offset_fn):
    x = x_ref[...]
    pe = pe_ref[...]
    if pe.ndim < x.ndim:
        pe = pe[None]
    y = x + pe                      # native dtype (bf16 stays bf16 on v6e/v7x)

    # Stateless counter-based PRNG: hash(seed, global element index).
    # Works on TPU and in interpret mode; the handful of int ops per element is
    # hidden under HBM bandwidth on this memory-bound kernel.
    shape = x.shape
    offs = offset_fn()
    lin = None
    for d, (stride, off) in enumerate(zip(strides, offs)):
        idx = lax.broadcasted_iota(jnp.int32, shape, d).astype(jnp.uint32)
        idx = idx + _to_u32(off)
        term = idx * jnp.uint32(stride)
        lin = term if lin is None else lin + term

    seed_u = seed_ref[0].astype(jnp.uint32)
    h = _mix32(lin)
    h = h ^ (seed_u * jnp.uint32(0x9E3779B9) + jnp.uint32(0x85EBCA6B))
    h = _mix32(h)

    keep = h < jnp.uint32(keep_threshold)
    kept = y * jnp.asarray(scale, dtype=y.dtype)
    o_ref[...] = jnp.where(keep, kept, jnp.zeros((), dtype=y.dtype)).astype(o_ref.dtype)


# ---------------------- parameter (buffer) setup ----------------------

def make_pe(d_model: int, max_len: int = 5000, dtype=jnp.float32):
    """Deterministic positional-encoding buffer, matching the PyTorch __init__."""
    position = jnp.arange(max_len, dtype=jnp.float32)[:, None]               # [max_len, 1]
    div_term = jnp.exp(jnp.arange(0, d_model, 2, dtype=jnp.float32)
                       * (-math.log(10000.0) / d_model))                     # [d_model/2]
    pe = jnp.zeros((max_len, d_model), dtype=jnp.float32)
    pe = pe.at[:, 0::2].set(jnp.sin(position * div_term))
    pe = pe.at[:, 1::2].set(jnp.cos(position * div_term))
    return pe.astype(dtype)                                                   # [max_len, d_model]


# -------------------------- tiling helpers ---------------------------

_TARGET_BLOCK_BYTES = 2 << 20   # ~2 MiB x-blocks: near HBM roofline on all gens,
                                # safe under v7x's 64 MiB VMEM when double-buffered.


def _largest_divisor_leq(n, cap):
    cap = max(1, min(n, cap))
    for d in range(cap, 0, -1):
        if n % d == 0:
            return d
    return 1


def _largest_aligned_divisor(total, cap, align):
    best = None
    for cand in range(align, min(cap, total) + 1, align):
        if total % cand == 0:
            best = cand
    return best


def _pick_tile(total, cap, align):
    """Tile <= cap, a multiple of `align` (preferring divisors of total) or full extent."""
    if total <= cap:
        return total
    best = _largest_aligned_divisor(total, cap, align)
    if best is not None:
        return best
    return max(align, (cap // align) * align)


def _round_up(v, m):
    return -(-v // m) * m


def _block_vmem_bytes(shape, itemsize):
    padded = list(shape)
    padded[-1] = _round_up(padded[-1], 128)
    if len(padded) >= 2:
        padded[-2] = _round_up(padded[-2], 8)
    n = 1
    for s in padded:
        n *= s
    return n * itemsize


def _vmem_limit(block_shapes, itemsize):
    # 2 buffers per array (double buffering) + slack, clamped to sane bounds
    # (v5e scoped default is only 16 MiB; v7x physical VMEM is 64 MiB).
    need = 2 * sum(_block_vmem_bytes(s, itemsize) for s in block_shapes)
    return int(min(max(need + (2 << 20), 8 << 20), 32 << 20))


# ------------------------------ wrapper ------------------------------

def cosine_positional_encoding(x, pe, *, dropout_p=0.1, training=False, seed=0,
                               donate_x=False):
    """x: [BS, L, N]; pe: [max_len, N] (from make_pe). Returns [BS, L, N]."""
    BS, L, N = x.shape
    itemsize = jnp.dtype(x.dtype).itemsize
    pe = pe.astype(x.dtype)          # single cast in the wrapper, not per-tile

    if N % 128 == 0:
        # ---- lane-dense 3-D tiling, grid = (l_tiles, batch_tiles), batch innermost ----
        # pe's block index depends only on l, so Pallas skips the pe DMA while b sweeps.
        TB = _largest_divisor_leq(BS, 8)
        tl_budget = max(8, int(_TARGET_BLOCK_BYTES // max(1, TB * N * itemsize)))
        TL = _pick_tile(L, tl_budget, 8)
        n_l, n_b = pl.cdiv(L, TL), pl.cdiv(BS, TB)
        if n_l * n_b < 2:
            # Keep >= 2 grid steps so both v7x TensorCores get work.
            if BS >= 2:
                TB = _largest_divisor_leq(BS, max(1, TB // 2))
            elif L >= 16:
                TL = _pick_tile(L, max(8, ((L // 2) // 8) * 8), 8)
            n_l, n_b = pl.cdiv(L, TL), pl.cdiv(BS, TB)

        grid = (n_l, n_b)
        x_in = x
        pe_in = pe[:L]               # same row extent as x's L axis -> tiles stay aligned
        x_spec = pl.BlockSpec((TB, TL, N), lambda l, b, *_: (b, l, 0))
        pe_spec = pl.BlockSpec((TL, N), lambda l, b, *_: (l, 0))
        out_spec = pl.BlockSpec((TB, TL, N), lambda l, b, *_: (b, l, 0))
        out_struct = jax.ShapeDtypeStruct((BS, L, N), x.dtype)
        unflatten = lambda o: o
        dim_sem = ("parallel", "parallel")
        block_shapes = [(TB, TL, N), (TL, N), (TB, TL, N)]
        strides = (n_l * TL * N, N, 1)
        offset_fn = lambda: (pl.program_id(1) * TB, pl.program_id(0) * TL, 0)
    else:
        # -------- flatten to [BS, L*N]: lane-dense 128-aligned chunks, pe read once --------
        # TODO(synk): for BS < 8 the (BS, TC) block pads the sublane dim to 8; acceptable
        # for this HBM-bound op, revisit only if tiny batches ever make VALU work visible.
        M = L * N
        x_in = x.reshape(BS, M)
        pe_in = pe[:L].reshape(1, M)
        tc_budget = max(128, int(_TARGET_BLOCK_BYTES // max(1, BS * itemsize)))
        TC = _pick_tile(M, tc_budget, 128)
        if pl.cdiv(M, TC) < 2 and M >= 256:
            TC = _pick_tile(M, max(128, ((M // 2) // 128) * 128), 128)
        n_c = pl.cdiv(M, TC)

        grid = (n_c,)
        x_spec = pl.BlockSpec((BS, TC), lambda c, *_: (0, c))
        pe_spec = pl.BlockSpec((1, TC), lambda c, *_: (0, c))
        out_spec = pl.BlockSpec((BS, TC), lambda c, *_: (0, c))
        out_struct = jax.ShapeDtypeStruct((BS, M), x.dtype)
        unflatten = lambda o: o.reshape(BS, L, N)
        dim_sem = ("parallel",)
        block_shapes = [(BS, TC), (1, TC), (BS, TC)]
        strides = (n_c * TC, 1)
        offset_fn = lambda: (0, pl.program_id(0) * TC)

    compiler_params = pltpu.CompilerParams(
        dimension_semantics=dim_sem,
        vmem_limit_bytes=_vmem_limit(block_shapes, itemsize))

    apply_dropout = training and dropout_p > 0.0
    if not apply_dropout:
        # eval mode: dropout is the identity
        out = pl.pallas_call(
            _add_pe_kernel,
            out_shape=out_struct,
            grid_spec=pltpu.PrefetchScalarGridSpec(
                num_scalar_prefetch=0,
                grid=grid,
                in_specs=[x_spec, pe_spec],
                out_specs=out_spec),
            compiler_params=compiler_params,
            input_output_aliases=({0: 0} if donate_x else {}),
        )(x_in, pe_in)
        return unflatten(out)

    if dropout_p >= 1.0:
        return jnp.zeros_like(x)

    # TODO(synk): PyTorch's dropout RNG stream cannot be reproduced bit-exactly;
    # a stateless hash PRNG with the same keep-probability / scaling is used.
    keep_prob = 1.0 - float(dropout_p)
    keep_threshold = min(int(round(keep_prob * (1 << 32))), (1 << 32) - 1)
    kernel = functools.partial(
        _add_pe_dropout_kernel,
        keep_threshold=keep_threshold,
        scale=1.0 / keep_prob,
        strides=strides,
        offset_fn=offset_fn)
    seed_arr = jnp.asarray([seed], dtype=jnp.int32)
    out = pl.pallas_call(
        kernel,
        out_shape=out_struct,
        grid_spec=pltpu.PrefetchScalarGridSpec(
            num_scalar_prefetch=1,
            grid=grid,
            in_specs=[x_spec, pe_spec],
            out_specs=out_spec),
        compiler_params=compiler_params,
    )(seed_arr, x_in, pe_in)
    return unflatten(out)


# ------------------------------- main -------------------------------

if __name__ == "__main__":
    max_len = 64
    key = jax.random.PRNGKey(0)
    k1, k2 = jax.random.split(key)

    # Case 1: d_model < 128 -> lane-dense flattened 2-D path (2 chunks).
    BS, L, d_model = 2, 8, 32
    x = jax.random.normal(k1, (BS, L, d_model), dtype=jnp.float32)
    pe = make_pe(d_model, max_len)

    out = jax.block_until_ready(
        cosine_positional_encoding(x, pe, dropout_p=0.1, training=False))
    ref = np.asarray(x) + np.asarray(pe[:L])[None, :, :]
    np.testing.assert_allclose(np.asarray(out), ref, rtol=1e-6, atol=1e-6)
    assert out.shape == (BS, L, d_model) and out.dtype == x.dtype

    # Case 2: d_model multiple of 128 -> 3-D path, grid = (l_tiles, batch_tiles).
    BS2, L2, d_model2 = 2, 16, 128
    x2 = jax.random.normal(k2, (BS2, L2, d_model2), dtype=jnp.float32)
    pe2 = make_pe(d_model2, max_len)
    out2 = jax.block_until_ready(
        cosine_positional_encoding(x2, pe2, dropout_p=0.1, training=False))
    ref2 = np.asarray(x2) + np.asarray(pe2[:L2])[None, :, :]
    np.testing.assert_allclose(np.asarray(out2), ref2, rtol=1e-6, atol=1e-6)

    # Training sanity: every element is either 0 or (x + pe) / (1 - p).
    p = 0.1
    out_tr = jax.block_until_ready(
        cosine_positional_encoding(x, pe, dropout_p=p, training=True, seed=1234))
    out_tr_np = np.asarray(out_tr)
    scaled = ref / (1.0 - p)
    ok = (np.isclose(out_tr_np, 0.0, atol=1e-6)
          | np.isclose(out_tr_np, scaled, rtol=1e-5, atol=1e-6))
    assert np.all(ok)
    assert out_tr.shape == x.shape and out_tr.dtype == x.dtype

    out_tr2 = jax.block_until_ready(
        cosine_positional_encoding(x2, pe2, dropout_p=p, training=True, seed=7))
    out_tr2_np = np.asarray(out_tr2)
    scaled2 = ref2 / (1.0 - p)
    ok2 = (np.isclose(out_tr2_np, 0.0, atol=1e-6)
           | np.isclose(out_tr2_np, scaled2, rtol=1e-5, atol=1e-6))
    assert np.all(ok2)

    print("KERNEL_OK")
</pallas_src>

<mosaic_0001>
module attributes {stable_mosaic.version = 11 : i64} {
  func.func @_add_pe_kernel(%arg0: i32, %arg1: memref<2x128xf32, #tpu.memory_space<vmem>>, %arg2: memref<1x128xf32, #tpu.memory_space<vmem>>, %arg3: memref<2x128xf32, #tpu.memory_space<vmem>>) attributes {dimension_semantics = [#tpu.dimension_semantics<parallel>], iteration_bounds = array<i64: 2>, scalar_prefetch = 0 : i64, scratch_operands = 0 : i64, tpu.core_type = #tpu.core_type<tc>, window_params = [{transform_indices = @transform_0, window_bounds = array<i64: 2, 128>}, {transform_indices = @transform_1, window_bounds = array<i64: 1, 128>}, {transform_indices = @transform_2, window_bounds = array<i64: 2, 128>}]} {
    %c0 = arith.constant 0 : index
    %c0_0 = arith.constant 0 : index
    %0 = vector.load %arg1[%c0, %c0_0] : memref<2x128xf32, #tpu.memory_space<vmem>>, vector<2x128xf32>
    %c0_1 = arith.constant 0 : index
    %c0_2 = arith.constant 0 : index
    %1 = vector.load %arg2[%c0_1, %c0_2] : memref<1x128xf32, #tpu.memory_space<vmem>>, vector<1x128xf32>
    %2 = vector.broadcast %1 : vector<1x128xf32> to vector<2x128xf32>
    %3 = arith.addf %0, %2 : vector<2x128xf32>
    %c0_3 = arith.constant 0 : index
    %c0_4 = arith.constant 0 : index
    %4 = vector.load %arg3[%c0_3, %c0_4] : memref<2x128xf32, #tpu.memory_space<vmem>>, vector<2x128xf32>
    tpu.vector_store %arg3[%c0_3, %c0_4], %3 {strides = array<i32>} : memref<2x128xf32, #tpu.memory_space<vmem>>, vector<2x128xf32>,
    return
  }
  func.func @transform_0(%arg0: i32) -> (i32, i32) {
    %c0_i32 = arith.constant 0 : i32
    %c0_i32_0 = arith.constant 0 : i32
    return %c0_i32, %arg0 : i32, i32
  }
  func.func @transform_1(%arg0: i32) -> (i32, i32) {
    %c0_i32 = arith.constant 0 : i32
    %c0_i32_0 = arith.constant 0 : i32
    return %c0_i32, %arg0 : i32, i32
  }
  func.func @transform_2(%arg0: i32) -> (i32, i32) {
    %c0_i32 = arith.constant 0 : i32
    %c0_i32_0 = arith.constant 0 : i32
    return %c0_i32, %arg0 : i32, i32
  }
}

</mosaic_0001>

<llo_original>
// kernel: tpu_custom_call.1
$region0: #{tpu_custom_call.1}
  #allocation0 [shape = 'u32[]', space=smem, size = 0x4, offset = 0x4, fixed_abs, tag = 'smem constant byte address 0x4 - core index']
  #allocation1 [shape = 'u32[72,128]{1,0:T(1,128)}', space=vmem, size = 0x9000, scoped, tag = 'internal scratch']
  %s0 = inlined_call_operand.hbm [shape: f32[2,256], index: 0, kind: input, shape index: {}]
  %s1 = inlined_call_operand.hbm [shape: f32[1,256], index: 1, kind: input, shape index: {}]
  %s2 = inlined_call_operand.hbm [shape: f32[2,256], index: 2, kind: output, shape index: {}]
  %s3 = sld [smem:[#allocation0]]
  $region49: #{tpu_custom_call.1} parent=0
    _
  %s5 = ssub.s32 1, %s3
  %s6 = scalar_select 0, %s5, %s3
  $region1: #{tpu_custom_call.1} parent=0
    #allocation2 [shape = 'u8[2048]{0}', space=vmem, size = 0x800, scoped, tag = 'input window, operand 0']
    #allocation3 [shape = 's32[2]{0}', space=sflag, size = 0x8, scoped, tag = 'scoped memory for tpu_custom_call.1']
    #allocation4 [shape = 's32[2]{0}', space=sflag, size = 0x8, scoped, tag = 'scoped memory for tpu_custom_call.1']
    #allocation5 [shape = 'u8[1024]{0}', space=vmem, size = 0x400, scoped, tag = 'input window, operand 1']
    #allocation6 [shape = 's32[2]{0}', space=sflag, size = 0x8, scoped, tag = 'scoped memory for tpu_custom_call.1']
    #allocation7 [shape = 'u8[2048]{0}', space=vmem, size = 0x800, scoped, tag = 'output window, operand 0']
    %7 = vsyncpa [#allocation3], 0
    %s8 = scalar_lea.sflag [#allocation3], 1
    %9 = vsyncpa %s8, 0
    %10 = vsyncpa [#allocation6], 0
    %s11 = scalar_lea.sflag [#allocation6], 1
    %12 = vsyncpa %s11, 0
    %13 = vsyncpa [#allocation4], 0
    %s14 = scalar_lea.sflag [#allocation4], 1
    %15 = vsyncpa %s14, 0
    loop: start=0, step=1, limit=4
    $region2: #{tpu_custom_call.1} parent=1 // loop_pre_header
      _
    $region3: #{tpu_custom_call.1} parent=1 // loop_header
      %s17 = sphi 0, %s21
      %p18 = scmp.ge.s32.totalorder %s17, 4
      %s27 = sphi 0, %s29
      %s30 = sphi 0, %s27
      %s31 = sphi 0, %s30
      %s47 = sphi 0, %s31
      %s53 = sphi 0, %s55
      %s56 = sphi 0, %s53
      %s57 = sphi 0, %s56
      %s73 = sphi 0, %s57
      %s79 = sphi 0, %s81
      %s82 = sphi 0, %s79
      %s83 = sphi 0, %s82
      %s99 = sphi 0, %s83
    $region4: #{tpu_custom_call.1} parent=1 // loop_header_branch
      %20 = sbr.rel (%p18) target = $region8
    $region5: #{tpu_custom_call.1} parent=1 // loop_body
      %s22 = ssub.s32 %s17, 1
      %s23 = ssub.s32 %s17, 2
      %s24 = sadd.s32 %s17, 1
      %s25 = ssub.s32 %s17, %s24
      %p26 = scmp.eq.s32.totalorder %s25, 0
      %s28 = sadd.s32 %s27, 1
      %s29 = scalar_select %p26, %s27, %s28
      %p32 = pneg %p26
      %p33 = scmp.eq.s32.totalorder %s17, 1
      %p34 = por %p32, %p33
      %p35 = scmp.ne.s32.totalorder %s27, %s30
      %p36 = scmp.eq.s32.totalorder %s17, 0
      %p37 = por %p35, %p36
      %p38 = scmp.ne.s32.totalorder %s27, %s30
      %p39 = scmp.eq.s32.totalorder %s22, 1
      %p40 = por %p38, %p39
      %p41 = scmp.ne.s32.totalorder %s30, %s31
      %p42 = scmp.eq.s32.totalorder %s22, 0
      %p43 = por %p41, %p42
      %p44 = scmp.ne.s32.totalorder %s30, %s31
      %p45 = scmp.eq.s32.totalorder %s23, 1
      %p46 = por %p44, %p45
      %p48 = scmp.ne.s32.totalorder %s31, %s47
      %p49 = scmp.eq.s32.totalorder %s23, 0
      %p50 = por %p48, %p49
      %s51 = ssub.s32 %s17, %s24
      %p52 = scmp.eq.s32.totalorder %s51, 0
      %s54 = sadd.s32 %s53, 1
      %s55 = scalar_select %p52, %s53, %s54
      %p58 = pneg %p52
      %p59 = scmp.eq.s32.totalorder %s17, 1
      %p60 = por %p58, %p59
      %p61 = scmp.ne.s32.totalorder %s53, %s56
      %p62 = scmp.eq.s32.totalorder %s17, 0
      %p63 = por %p61, %p62
      %p64 = scmp.ne.s32.totalorder %s53, %s56
      %p65 = scmp.eq.s32.totalorder %s22, 1
      %p66 = por %p64, %p65
      %p67 = scmp.ne.s32.totalorder %s56, %s57
      %p68 = scmp.eq.s32.totalorder %s22, 0
      %p69 = por %p67, %p68
      %p70 = scmp.ne.s32.totalorder %s56, %s57
      %p71 = scmp.eq.s32.totalorder %s23, 1
      %p72 = por %p70, %p71
      %p74 = scmp.ne.s32.totalorder %s57, %s73
      %p75 = scmp.eq.s32.totalorder %s23, 0
      %p76 = por %p74, %p75
      %s77 = ssub.s32 %s17, %s24
      %p78 = scmp.eq.s32.totalorder %s77, 0
      %s80 = sadd.s32 %s79, 1
      %s81 = scalar_select %p78, %s79, %s80
      %p84 = pneg %p78
      %p85 = scmp.eq.s32.totalorder %s17, 1
      %p86 = por %p84, %p85
      %p87 = scmp.ne.s32.totalorder %s79, %s82
      %p88 = scmp.eq.s32.totalorder %s17, 0
      %p89 = por %p87, %p88
      %p90 = scmp.ne.s32.totalorder %s79, %s82
      %p91 = scmp.eq.s32.totalorder %s22, 1
      %p92 = por %p90, %p91
      %p93 = scmp.ne.s32.totalorder %s82, %s83
      %p94 = scmp.eq.s32.totalorder %s22, 0
      %p95 = por %p93, %p94
      %p96 = scmp.ne.s32.totalorder %s82, %s83
      %p97 = scmp.eq.s32.totalorder %s23, 1
      %p98 = por %p96, %p97
      %p100 = scmp.ne.s32.totalorder %s83, %s99
      %p101 = scmp.eq.s32.totalorder %s23, 0
      %p102 = por %p100, %p101
      %p103 = scmp.le.s32.totalorder 1, %s17
      %p104 = scmp.lt.s32.totalorder %s17, 3
      %p105 = pnand %p103, %p104
      %p106 = pneg %p105
      // Predicated region
      $region9: #{tpu_custom_call.1} parent=5 // pred_check
        _
      $region10: #{tpu_custom_call.1} parent=5 // pred_check_branch
        %108 = sbr.rel (%p105) target = $region12
      $region11: #{tpu_custom_call.1} parent=5 // pred_region
        %s109 = ssub.s32 %s17, 1
      $region12: #{tpu_custom_call.1} parent=5 // pred_fallthru
        _
      %p110 = scmp.lt.s32.totalorder %s17, 2
      // Predicated region
      $region13: #{tpu_custom_call.1} parent=5 // pred_check
        %p111 = pneg %p110
      $region14: #{tpu_custom_call.1} parent=5 // pred_check_branch
        %113 = sbr.rel (%p111) target = $region16
      $region15: #{tpu_custom_call.1} parent=5 // pred_region
        // Predicated region
        $region17: #{tpu_custom_call.1} parent=15 // pred_check
          %p114 = pneg %p37
        $region18: #{tpu_custom_call.1} parent=15 // pred_check_branch
          %116 = sbr.rel (%p114) target = $region20
        $region19: #{tpu_custom_call.1} parent=15 // pred_region
          %s117 = sand.u32 %s27, 1
          %s118 = scalar_lea.sflag [#allocation3], %s117
          %s119 = sand.u32 %s27, 1
          %s120 = smul.addr %s119, 2
          %s121 = scalar_lea.vmem [#allocation2], %s120
          %123 = vsyncadd %s118, 0
          %s124 = smul.addr %s17, 2
          %s125 = scalar_lea.hbm %s0, %s124
          %s127 = sshll.u32 %s125, 4
          %s128 = int_to_ptr.hbm [resolvable:$true] %s127
          %s129 = sshll.u32 %s121, 4
          %s130 = int_to_ptr.vmem [resolvable:$true] %s129
          %132 = dma.hbm_to_vmem [thread:$0]  %s128, 32, %s130, %s118
        $region20: #{tpu_custom_call.1} parent=15 // pred_fallthru
          _
        // Predicated region
        $region21: #{tpu_custom_call.1} parent=15 // pred_check
          %p133 = pneg %p63
        $region22: #{tpu_custom_call.1} parent=15 // pred_check_branch
          %135 = sbr.rel (%p133) target = $region24
        $region23: #{tpu_custom_call.1} parent=15 // pred_region
          %s136 = sand.u32 %s53, 1
          %s137 = scalar_lea.sflag [#allocation6], %s136
          %s138 = sand.u32 %s53, 1
          %s139 = scalar_lea.vmem [#allocation5], %s138
          %141 = vsyncadd %s137, 0
          %s142 = scalar_lea.hbm %s1, %s17
          %s144 = sshll.u32 %s142, 4
          %s145 = int_to_ptr.hbm [resolvable:$true] %s144
          %s146 = sshll.u32 %s139, 4
          %s147 = int_to_ptr.vmem [resolvable:$true] %s146
          %149 = dma.hbm_to_vmem [thread:$0]  %s145, 16, %s147, %s137
        $region24: #{tpu_custom_call.1} parent=15 // pred_fallthru
          _
      $region16: #{tpu_custom_call.1} parent=5 // pred_fallthru
        _
      %p150 = scmp.le.s32.totalorder 1, %s17
      %p151 = scmp.lt.s32.totalorder %s17, 3
      %p152 = pnand %p150, %p151
      %p153 = pneg %p152
      // Predicated region
      $region25: #{tpu_custom_call.1} parent=5 // pred_check
        _
      $region26: #{tpu_custom_call.1} parent=5 // pred_check_branch
        %155 = sbr.rel (%p152) target = $region28
      $region27: #{tpu_custom_call.1} parent=5 // pred_region
        %s156 = ssub.s32 %s17, 1
        %s157 = sand.u32 %s30, 1
        %s158 = scalar_lea.sflag [#allocation3], %s157
        %s159 = sand.u32 %s30, 1
        %s160 = smul.addr %s159, 2
        %s161 = scalar_lea.vmem [#allocation2], %s160
        // Predicated region
        $region29: #{tpu_custom_call.1} parent=27 // pred_check
          %p162 = pneg %p43
        $region30: #{tpu_custom_call.1} parent=27 // pred_check_branch
          %164 = sbr.rel (%p162) target = $region32
        $region31: #{tpu_custom_call.1} parent=27 // pred_region
          %166 = dma.done %s158, 32
        $region32: #{tpu_custom_call.1} parent=27 // pred_fallthru
          _
        %s167 = sand.u32 %s56, 1
        %s168 = scalar_lea.sflag [#allocation6], %s167
        %s169 = sand.u32 %s56, 1
        %s170 = scalar_lea.vmem [#allocation5], %s169
        // Predicated region
        $region33: #{tpu_custom_call.1} parent=27 // pred_check
          %p171 = pneg %p69
        $region34: #{tpu_custom_call.1} parent=27 // pred_check_branch
          %173 = sbr.rel (%p171) target = $region36
        $region35: #{tpu_custom_call.1} parent=27 // pred_region
          %175 = dma.done %s168, 16
        $region36: #{tpu_custom_call.1} parent=27 // pred_fallthru
          _
        %s176 = sand.u32 %s30, 1
        %s177 = scalar_lea.sflag [#allocation3], %s176
        %s178 = sand.u32 %s30, 1
        %s179 = smul.addr %s178, 2
        %s180 = scalar_lea.vmem [#allocation2], %s179
        %p181 = pneg %p43
        %p182 = pneg %p40
        %s183 = sand.u32 %s56, 1
        %s184 = scalar_lea.sflag [#allocation6], %s183
        %s185 = sand.u32 %s56, 1
        %s186 = scalar_lea.vmem [#allocation5], %s185
        %p187 = pneg %p69
        %p188 = pneg %p66
        %p189 = pneg %p95
        %p190 = pneg %p92
        %s191 = sand.u32 %s82, 1
        %s192 = scalar_lea.sflag [#allocation4], %s191
        %s193 = sand.u32 %s82, 1
        %s194 = smul.addr %s193, 2
        %s195 = scalar_lea.vmem [#allocation7], %s194
        %v196 = vld [vmem:[%s161] sm:$0x3]
        %v197 = vld [vmem:[%s170] sm:$0x1]
        %v199 = vperm.slane %v197, 0
        %v201 = vadd.f32 %v196, %v199
        %202 = vst [vmem:[%s195] sm:$0x3] %v201
        %s203 = sand.u32 %s82, 1
        %s204 = scalar_lea.sflag [#allocation4], %s203
        %s205 = sand.u32 %s82, 1
        %s206 = smul.addr %s205, 2
        %s207 = scalar_lea.vmem [#allocation7], %s206
        // Predicated region
        $region37: #{tpu_custom_call.1} parent=27 // pred_check
          %p208 = pneg %p92
        $region38: #{tpu_custom_call.1} parent=27 // pred_check_branch
          %210 = sbr.rel (%p208) target = $region40
        $region39: #{tpu_custom_call.1} parent=27 // pred_region
          %212 = vsyncadd %s204, 0
          %s213 = smul.addr %s22, 2
          %s214 = scalar_lea.hbm %s2, %s213
          %s216 = sshll.u32 %s207, 4
          %s217 = int_to_ptr.vmem [resolvable:$true] %s216
          %s218 = sshll.u32 %s214, 4
          %s219 = int_to_ptr.hbm [resolvable:$true] %s218
          %221 = dma.vmem_to_hbm [thread:$0]  %s217, 32, %s219, %s204
        $region40: #{tpu_custom_call.1} parent=27 // pred_fallthru
          _
      $region28: #{tpu_custom_call.1} parent=5 // pred_fallthru
        _
      %p222 = scmp.le.s32.totalorder 2, %s17
      // Predicated region
      $region41: #{tpu_custom_call.1} parent=5 // pred_check
        %p223 = pneg %p222
      $region42: #{tpu_custom_call.1} parent=5 // pred_check_branch
        %225 = sbr.rel (%p223) target = $region44
      $region43: #{tpu_custom_call.1} parent=5 // pred_region
        %s226 = ssub.s32 %s17, 2
        // Predicated region
        $region45: #{tpu_custom_call.1} parent=43 // pred_check
          %p227 = pneg %p98
        $region46: #{tpu_custom_call.1} parent=43 // pred_check_branch
          %229 = sbr.rel (%p227) target = $region48
        $region47: #{tpu_custom_call.1} parent=43 // pred_region
          %s230 = sand.u32 %s83, 1
          %s231 = scalar_lea.sflag [#allocation4], %s230
          %s232 = sand.u32 %s83, 1
          %s233 = smul.addr %s232, 2
          %s234 = scalar_lea.vmem [#allocation7], %s233
          %236 = dma.done %s231, 32
        $region48: #{tpu_custom_call.1} parent=43 // pred_fallthru
          _
      $region44: #{tpu_custom_call.1} parent=5 // pred_fallthru
        _
    $region6: #{tpu_custom_call.1} parent=1 // loop_footer
      %s21 = sadd.s32 1, %s17
    $region7: #{tpu_custom_call.1} parent=1 // loop_footer_branch
      %16 = sbr.rel target = $region3
    $region8: #{tpu_custom_call.1} parent=1 // loop_exit
      _
    %237 = vsyncpa [#allocation3], 1
    %s238 = scalar_lea.sflag [#allocation3], 1
    %239 = vsyncpa %s238, 1
    %240 = vsyncpa [#allocation6], 1
    %s241 = scalar_lea.sflag [#allocation6], 1
    %242 = vsyncpa %s241, 1
    %243 = vsyncpa [#allocation4], 1
    %s244 = scalar_lea.sflag [#allocation4], 1
    %245 = vsyncpa %s244, 1

</llo_original>
